<compile_context>
chip_gen: v6e
topology: v6e:2x2x1
jax: 0.10.0
libtpu: 0.0.40
codegen_flags: <defaults>
</compile_context>

<pallas_src>
import numpy as np
import jax
import jax.numpy as jnp
from jax.experimental import pallas as pl
from jax.experimental.pallas import tpu as pltpu


# ----------------------------------------------------------------------------------------
# Phase 1: hw2 = ReLU(A @ (x @ W1 + b1)) @ W2 + b2          (one A row-slab per grid step)
# ----------------------------------------------------------------------------------------
def encode_kernel(a_ref, x_ref, w1_ref, b1_ref, w2_ref, b2_ref, hw2_ref):
    # xw is recomputed per row block (relative cost ~ embed_dim / TILE_N of the A@xw
    # matmul); this avoids cross-core scratch-init hazards under "parallel" semantics.
    # TODO(synk): for large embed_dim, hoist x @ W1 + b1 into its own tiny pallas_call.
    xw = jnp.dot(x_ref[...], w1_ref[...], preferred_element_type=jnp.float32) + b1_ref[...]
    # Big matmul: bf16 operands (MXU-native on all generations), f32 accumulate.
    h = jnp.maximum(
        jnp.dot(a_ref[...], xw.astype(jnp.bfloat16), preferred_element_type=jnp.float32),
        0.0)
    # h @ W2 is tiny -> left in f32.
    hw2 = jnp.dot(h, w2_ref[...], preferred_element_type=jnp.float32) + b2_ref[...]
    hw2_ref[...] = hw2.astype(hw2_ref.dtype)   # stored bf16: only ever an MXU operand


# ----------------------------------------------------------------------------------------
# Phase 2: mu|logvar = A @ hw2 ;  z = mu + eps*std ;  per-row KL partials ;  z and z^T out
# ----------------------------------------------------------------------------------------
def reparam_kernel(a_ref, hw2_ref, eps_ref, z_ref, zt_ref, kl_ref):
    z_dim = eps_ref.shape[1]
    # Fused mu|logvar branches: ONE (TILE_N, N) @ (N, 2*z_dim) bf16 matmul, f32 accumulate.
    mu_logvar = jnp.dot(a_ref[...], hw2_ref[...], preferred_element_type=jnp.float32)
    # NOTE: slicing at z_dim < 128 splits inside one vreg; negligible at z_dim=16
    # (low-priority review item; revisit with lane masks / pltpu.roll if z_dim grows).
    mu = mu_logvar[:, :z_dim]
    logvar = mu_logvar[:, z_dim:]
    std = jnp.exp(0.5 * logvar)      # full dynamic range, matches the torch reference
    var = std * std                  # == exp(logvar), reused by KL (single EUP exp pass)
    z = mu + eps_ref[...] * std
    z_ref[...] = z
    # Materialize z^T once (bf16) so decode's RHS needs no per-block relayout/transpose.
    zt_ref[...] = z.T.astype(zt_ref.dtype)
    # Per-row KL partial; reduced to a scalar in the wrapper.
    kl_ref[...] = jnp.sum(1.0 + logvar - mu * mu - var, axis=-1, keepdims=True)


# ----------------------------------------------------------------------------------------
# Phase 3: gene_A row slab = z_slab @ z^T ;  soft-target cross-entropy per-row partials
# ----------------------------------------------------------------------------------------
def decode_ce_kernel(z_ref, zt_ref, label_ref, gene_ref, ce_ref):
    gene = jnp.dot(z_ref[...].astype(jnp.bfloat16), zt_ref[...],
                   preferred_element_type=jnp.float32)
    gene_ref[...] = gene
    # Soft-target CE rows without materializing the (TILE_N, N) log_softmax:
    #   sum_c t*(shifted - lse) = sum_c t*shifted - (sum_c t) * lse    (exact identity)
    t = label_ref[...].astype(jnp.float32)   # labels arrive bf16; elementwise/EUP math in f32
    row_max = jnp.max(gene, axis=-1, keepdims=True)
    shifted = gene - row_max
    lse = jnp.log(jnp.sum(jnp.exp(shifted), axis=-1, keepdims=True))
    label_sum = jnp.sum(t, axis=-1, keepdims=True)
    ce_ref[...] = jnp.sum(t * shifted, axis=-1, keepdims=True) - label_sum * lse


def vgae_forward(x, a_norm_bf16, a_label_bf16, params, eps, *, tile_n=128):
    N, E = x.shape
    H = params["w1"].shape[1]
    Z = eps.shape[1]
    assert N % tile_n == 0, "TODO(synk): pad/mask a ragged last row block"
    nb = N // tile_n

    par = pltpu.CompilerParams(dimension_semantics=("parallel",))
    # TODO(synk): for large N on v5e/v6e, raise vmem_limit_bytes and grow tile_n; on v7x
    #             keep double-buffered slabs within the 64 MiB budget (tile_n ~ 256 at N=4k).

    f32b, bf16b = 4, 2
    row = lambda i: (i, 0)
    full2d = lambda i: (0, 0)

    # ---- phase 1: hw2 ----
    hw2 = pl.pallas_call(
        encode_kernel,
        out_shape=jax.ShapeDtypeStruct((N, 2 * Z), jnp.bfloat16),
        grid=(nb,),
        in_specs=[
            pl.BlockSpec((tile_n, N), row),       # A_norm row slab (bf16)
            pl.BlockSpec((N, E), full2d),         # x resident
            pl.BlockSpec((E, H), full2d),         # W1
            pl.BlockSpec((1, H), full2d),         # b1
            pl.BlockSpec((H, 2 * Z), full2d),     # W2 (fused w21|w22)
            pl.BlockSpec((1, 2 * Z), full2d),     # b2 (fused b21|b22)
        ],
        out_specs=pl.BlockSpec((tile_n, 2 * Z), row),
        compiler_params=par,
        cost_estimate=pl.CostEstimate(
            flops=int(2 * N * E * H * nb + 2 * N * N * H + 2 * N * H * 2 * Z),
            transcendentals=0,
            bytes_accessed=int(bf16b * N * N + bf16b * N * 2 * Z
                               + f32b * (N * E + E * H + H + H * 2 * Z + 2 * Z))),
    )(a_norm_bf16, x, params["w1"], params["b1"], params["w2"], params["b2"])

    # ---- phase 2: z, z^T, per-row KL ----
    z, z_t, kl_rows = pl.pallas_call(
        reparam_kernel,
        out_shape=(jax.ShapeDtypeStruct((N, Z), jnp.float32),
                   jax.ShapeDtypeStruct((Z, N), jnp.bfloat16),
                   jax.ShapeDtypeStruct((N, 1), jnp.float32)),
        grid=(nb,),
        in_specs=[
            pl.BlockSpec((tile_n, N), row),       # A_norm row slab (bf16)
            pl.BlockSpec((N, 2 * Z), full2d),     # hw2 resident (bf16)
            pl.BlockSpec((tile_n, Z), row),       # eps row slab
        ],
        out_specs=(pl.BlockSpec((tile_n, Z), row),
                   pl.BlockSpec((Z, tile_n), lambda i: (0, i)),
                   pl.BlockSpec((tile_n, 1), row)),
        compiler_params=par,
        cost_estimate=pl.CostEstimate(
            flops=int(2 * N * N * 2 * Z + 8 * N * Z),
            transcendentals=int(N * Z),
            bytes_accessed=int(bf16b * (N * N + N * 2 * Z + Z * N) + f32b * (2 * N * Z + N))),
    )(a_norm_bf16, hw2, eps)

    # ---- phase 3: decode + CE ----
    gene_a, ce_rows = pl.pallas_call(
        decode_ce_kernel,
        out_shape=(jax.ShapeDtypeStruct((N, N), jnp.float32),
                   jax.ShapeDtypeStruct((N, 1), jnp.float32)),
        grid=(nb,),
        in_specs=[
            pl.BlockSpec((tile_n, Z), row),       # z row slab (f32)
            pl.BlockSpec((Z, N), full2d),         # z^T resident (bf16)
            pl.BlockSpec((tile_n, N), row),       # A_label row slab (bf16)
        ],
        out_specs=(pl.BlockSpec((tile_n, N), row),
                   pl.BlockSpec((tile_n, 1), row)),
        compiler_params=par,
        cost_estimate=pl.CostEstimate(
            flops=int(2 * N * N * Z + 8 * N * N),
            transcendentals=int(N * N + N),
            bytes_accessed=int(f32b * (N * Z + N * N + N) + bf16b * (Z * N + N * N))),
    )(z, z_t, a_label_bf16)
    # TODO(synk): when only the loss is consumed (training step), drop the gene_A output
    #             to cut ~1/3 of the N^2 HBM writeback.

    bce = -jnp.mean(ce_rows)
    kl = (-0.5 / N) * jnp.mean(kl_rows)
    return bce + kl, gene_a


def xavier_uniform(key, fan_in, fan_out):
    a = float(np.sqrt(6.0 / (fan_in + fan_out)))
    # stored as (in, out) so the kernels compute x @ W + b (== torch's x @ W.T + b)
    return jax.random.uniform(key, (fan_in, fan_out), jnp.float32, -a, a)


def jax_reference(x, a_norm, a_label, w1, b1, w21, b21, w22, b22, eps):
    h = jnp.maximum(a_norm @ (x @ w1 + b1), 0.0)
    mu = a_norm @ (h @ w21 + b21)
    logvar = a_norm @ (h @ w22 + b22)
    z = mu + eps * jnp.exp(0.5 * logvar)
    gene_a = z @ z.T
    log_sm = jax.nn.log_softmax(gene_a, axis=-1)
    bce = -jnp.mean(jnp.sum(a_label * log_sm, axis=-1))
    kl = (-0.5 / a_label.shape[0]) * jnp.mean(
        jnp.sum(1.0 + logvar - mu * mu - jnp.exp(logvar), axis=-1))
    return bce + kl, gene_a


if __name__ == "__main__":
    # Small shapes consistent with the module's forward (grid of 2 row blocks).
    N, embed_dim, hidden_dim, z_dim = 256, 64, 32, 16
    TILE_N = 128

    key = jax.random.PRNGKey(0)
    ks = jax.random.split(key, 8)

    x = jax.random.normal(ks[0], (N, embed_dim), jnp.float32)
    # symmetric-ish normalized adjacency surrogate
    a_raw = jax.random.uniform(ks[1], (N, N), jnp.float32)
    a_norm = (a_raw + a_raw.T) / (2.0 * N)
    # soft label "adjacency" (rows sum to 1, like class probabilities)
    a_lab_raw = jax.random.uniform(ks[2], (N, N), jnp.float32)
    a_label = a_lab_raw / jnp.sum(a_lab_raw, axis=-1, keepdims=True)

    w1 = xavier_uniform(ks[3], embed_dim, hidden_dim)
    b1 = jnp.zeros((1, hidden_dim), jnp.float32)
    w21 = xavier_uniform(ks[4], hidden_dim, z_dim)
    b21 = jnp.zeros((1, z_dim), jnp.float32)
    w22 = xavier_uniform(ks[5], hidden_dim, z_dim)
    b22 = jnp.zeros((1, z_dim), jnp.float32)

    # mu/logvar branch fusion hoisted to parameter init (no per-step concat).
    params = {
        "w1": w1, "b1": b1,
        "w2": jnp.concatenate([w21, w22], axis=1),
        "b2": jnp.concatenate([b21, b22], axis=1),
    }

    # Cast the N^2 arrays to bf16 ONCE at init; the kernels read them as bf16 slabs.
    a_norm_bf16 = a_norm.astype(jnp.bfloat16)
    a_label_bf16 = a_label.astype(jnp.bfloat16)

    # training-mode reparameterization noise, generated deterministically
    eps = jax.random.normal(ks[6], (N, z_dim), jnp.float32)
    # TODO(synk): drop_ratio defaults to 0.0 (dropout = identity); nonzero dropout would
    # need pltpu.prng_* masks inside the kernels.

    loss, gene_a = vgae_forward(x, a_norm_bf16, a_label_bf16, params, eps, tile_n=TILE_N)
    jax.block_until_ready((loss, gene_a))

    ref_loss, ref_gene_a = jax_reference(x, a_norm, a_label,
                                         w1, b1, w21, b21, w22, b22, eps)
    # bf16 MXU operands + bf16 adjacency/labels -> compare at bf16-appropriate tolerances
    # against the pure-f32 reference (was 1e-4 when everything ran in emulated f32).
    np.testing.assert_allclose(np.asarray(gene_a), np.asarray(ref_gene_a),
                               rtol=3e-2, atol=2.5e-1)
    np.testing.assert_allclose(float(loss), float(ref_loss), rtol=5e-2, atol=5e-2)

    print("KERNEL_OK")
</pallas_src>

<mosaic_0001>
module attributes {stable_mosaic.version = 11 : i64} {
  func.func @encode_kernel(%arg0: i32, %arg1: memref<128x256xbf16, #tpu.memory_space<vmem>>, %arg2: memref<256x64xf32, #tpu.memory_space<vmem>>, %arg3: memref<64x32xf32, #tpu.memory_space<vmem>>, %arg4: memref<1x32xf32, #tpu.memory_space<vmem>>, %arg5: memref<32x32xf32, #tpu.memory_space<vmem>>, %arg6: memref<1x32xf32, #tpu.memory_space<vmem>>, %arg7: memref<128x32xbf16, #tpu.memory_space<vmem>>) attributes {dimension_semantics = [#tpu.dimension_semantics<parallel>], iteration_bounds = array<i64: 2>, scalar_prefetch = 0 : i64, scratch_operands = 0 : i64, tpu.core_type = #tpu.core_type<tc>, window_params = [{transform_indices = @transform_0, window_bounds = array<i64: 128, 256>}, {pipeline_mode = #tpu.pipeline_mode<synchronous>, transform_indices = @transform_1, window_bounds = array<i64: 256, 64>}, {pipeline_mode = #tpu.pipeline_mode<synchronous>, transform_indices = @transform_2, window_bounds = array<i64: 64, 32>}, {pipeline_mode = #tpu.pipeline_mode<synchronous>, transform_indices = @transform_3, window_bounds = array<i64: 1, 32>}, {pipeline_mode = #tpu.pipeline_mode<synchronous>, transform_indices = @transform_4, window_bounds = array<i64: 32, 32>}, {pipeline_mode = #tpu.pipeline_mode<synchronous>, transform_indices = @transform_5, window_bounds = array<i64: 1, 32>}, {transform_indices = @transform_6, window_bounds = array<i64: 128, 32>}]} {
    %c0 = arith.constant 0 : index
    %c0_0 = arith.constant 0 : index
    %0 = vector.load %arg2[%c0, %c0_0] : memref<256x64xf32, #tpu.memory_space<vmem>>, vector<256x64xf32>
    %c0_1 = arith.constant 0 : index
    %c0_2 = arith.constant 0 : index
    %1 = vector.load %arg3[%c0_1, %c0_2] : memref<64x32xf32, #tpu.memory_space<vmem>>, vector<64x32xf32>
    %cst = arith.constant dense<0.000000e+00> : vector<256x32xf32>
    %2 = tpu.matmul %0, %1, %cst {dimension_numbers = #tpu.dot_dimension_numbers<[1], [0], [0], [1], [0, 0, 1, 1], [], []>} : vector<256x64xf32>, vector<64x32xf32>, vector<256x32xf32> -> vector<256x32xf32>
    %c0_3 = arith.constant 0 : index
    %c0_4 = arith.constant 0 : index
    %3 = vector.load %arg4[%c0_3, %c0_4] : memref<1x32xf32, #tpu.memory_space<vmem>>, vector<1x32xf32>
    %4 = vector.broadcast %3 : vector<1x32xf32> to vector<256x32xf32>
    %5 = arith.addf %2, %4 : vector<256x32xf32>
    %c0_5 = arith.constant 0 : index
    %c0_6 = arith.constant 0 : index
    %6 = vector.load %arg1[%c0_5, %c0_6] : memref<128x256xbf16, #tpu.memory_space<vmem>>, vector<128x256xbf16>
    %7 = arith.truncf %5 : vector<256x32xf32> to vector<256x32xbf16>
    %cst_7 = arith.constant dense<0.000000e+00> : vector<128x32xf32>
    %8 = tpu.matmul %6, %7, %cst_7 {dimension_numbers = #tpu.dot_dimension_numbers<[1], [0], [0], [1], [0, 0, 1, 1], [], []>} : vector<128x256xbf16>, vector<256x32xbf16>, vector<128x32xf32> -> vector<128x32xf32>
    %cst_8 = arith.constant 0.000000e+00 : f32
    %9 = vector.broadcast %cst_8 : f32 to vector<128x32xf32>
    %10 = arith.maximumf %8, %9 : vector<128x32xf32>
    %c0_9 = arith.constant 0 : index
    %c0_10 = arith.constant 0 : index
    %11 = vector.load %arg5[%c0_9, %c0_10] : memref<32x32xf32, #tpu.memory_space<vmem>>, vector<32x32xf32>
    %cst_11 = arith.constant dense<0.000000e+00> : vector<128x32xf32>
    %12 = tpu.matmul %10, %11, %cst_11 {dimension_numbers = #tpu.dot_dimension_numbers<[1], [0], [0], [1], [0, 0, 1, 1], [], []>} : vector<128x32xf32>, vector<32x32xf32>, vector<128x32xf32> -> vector<128x32xf32>
    %c0_12 = arith.constant 0 : index
    %c0_13 = arith.constant 0 : index
    %13 = vector.load %arg6[%c0_12, %c0_13] : memref<1x32xf32, #tpu.memory_space<vmem>>, vector<1x32xf32>
    %14 = vector.broadcast %13 : vector<1x32xf32> to vector<128x32xf32>
    %15 = arith.addf %12, %14 : vector<128x32xf32>
    %16 = arith.truncf %15 : vector<128x32xf32> to vector<128x32xbf16>
    %c0_14 = arith.constant 0 : index
    %c0_15 = arith.constant 0 : index
    %17 = vector.load %arg7[%c0_14, %c0_15] : memref<128x32xbf16, #tpu.memory_space<vmem>>, vector<128x32xbf16>
    tpu.vector_store %arg7[%c0_14, %c0_15], %16 {strides = array<i32>} : memref<128x32xbf16, #tpu.memory_space<vmem>>, vector<128x32xbf16>,
    return
  }
  func.func @transform_0(%arg0: i32) -> (i32, i32) {
    %c0_i32 = arith.constant 0 : i32
    %c0_i32_0 = arith.constant 0 : i32
    return %arg0, %c0_i32 : i32, i32
  }
  func.func @transform_1(%arg0: i32) -> (i32, i32) {
    %c0_i32 = arith.constant 0 : i32
    %c0_i32_0 = arith.constant 0 : i32
    %c0_i32_1 = arith.constant 0 : i32
    return %c0_i32, %c0_i32_0 : i32, i32
  }
  func.func @transform_2(%arg0: i32) -> (i32, i32) {
    %c0_i32 = arith.constant 0 : i32
    %c0_i32_0 = arith.constant 0 : i32
    %c0_i32_1 = arith.constant 0 : i32
    return %c0_i32, %c0_i32_0 : i32, i32
  }
  func.func @transform_3(%arg0: i32) -> (i32, i32) {
    %c0_i32 = arith.constant 0 : i32
    %c0_i32_0 = arith.constant 0 : i32
    %c0_i32_1 = arith.constant 0 : i32
    return %c0_i32, %c0_i32_0 : i32, i32
  }
  func.func @transform_4(%arg0: i32) -> (i32, i32) {
    %c0_i32 = arith.constant 0 : i32
    %c0_i32_0 = arith.constant 0 : i32
    %c0_i32_1 = arith.constant 0 : i32
    return %c0_i32, %c0_i32_0 : i32, i32
  }
  func.func @transform_5(%arg0: i32) -> (i32, i32) {
    %c0_i32 = arith.constant 0 : i32
    %c0_i32_0 = arith.constant 0 : i32
    %c0_i32_1 = arith.constant 0 : i32
    return %c0_i32, %c0_i32_0 : i32, i32
  }
  func.func @transform_6(%arg0: i32) -> (i32, i32) {
    %c0_i32 = arith.constant 0 : i32
    %c0_i32_0 = arith.constant 0 : i32
    return %arg0, %c0_i32 : i32, i32
  }
}

</mosaic_0001>

<llo_original>
// kernel: tpu_custom_call.1
$region0: #{tpu_custom_call.1}
  #allocation0 [shape = 'u32[]', space=smem, size = 0x4, offset = 0x4, fixed_abs, tag = 'smem constant byte address 0x4 - core index']
  #allocation1 [shape = 'u32[144,128]{1,0:T(1,128)}', space=vmem, size = 0x12000, scoped, tag = 'internal scratch']
  %s0 = inlined_call_operand.vmem [shape: bf16[256,256], index: 0, kind: input, shape index: {}]
  %s1 = inlined_call_operand.vmem [shape: f32[256,64], index: 1, kind: input, shape index: {}]
  %s2 = inlined_call_operand.vmem [shape: f32[64,32], index: 2, kind: input, shape index: {}]
  %s3 = inlined_call_operand.vmem [shape: f32[1,32], index: 3, kind: input, shape index: {}]
  %s4 = inlined_call_operand.vmem [shape: f32[32,32], index: 4, kind: input, shape index: {}]
  %s5 = inlined_call_operand.vmem [shape: f32[1,32], index: 5, kind: input, shape index: {}]
  %s6 = inlined_call_operand.vmem [shape: bf16[256,32], index: 6, kind: output, shape index: {}]
  %s7 = sld [smem:[#allocation0]]
  $region57: #{tpu_custom_call.1} parent=0
    _
  %s9 = ssub.s32 1, %s7
  %s10 = scalar_select 0, %s9, %s7
  loop: start=0, step=1, limit=4
  $region2: #{tpu_custom_call.1} parent=0 // loop_pre_header
    _
  $region3: #{tpu_custom_call.1} parent=0 // loop_header
    %s12 = sphi 0, %s16
    %p13 = scmp.ge.s32.totalorder %s12, 4
    %s22 = sphi 0, %s24
    %s25 = sphi 0, %s22
    %s26 = sphi 0, %s25
    %s42 = sphi 0, %s26
    %s46 = sphi 0, %s46
    %s48 = sphi 0, %s46
    %s49 = sphi 0, %s48
    %s63 = sphi 0, %s49
    %s67 = sphi 0, %s67
    %s69 = sphi 0, %s67
    %s70 = sphi 0, %s69
    %s84 = sphi 0, %s70
    %s88 = sphi 0, %s88
    %s90 = sphi 0, %s88
    %s91 = sphi 0, %s90
    %s105 = sphi 0, %s91
    %s109 = sphi 0, %s109
    %s111 = sphi 0, %s109
    %s112 = sphi 0, %s111
    %s126 = sphi 0, %s112
    %s130 = sphi 0, %s130
    %s132 = sphi 0, %s130
    %s133 = sphi 0, %s132
    %s147 = sphi 0, %s133
    %s153 = sphi 0, %s155
    %s156 = sphi 0, %s153
    %s157 = sphi 0, %s156
    %s173 = sphi 0, %s157
  $region4: #{tpu_custom_call.1} parent=0 // loop_header_branch
    %15 = sbr.rel (%p13) target = $region8
  $region5: #{tpu_custom_call.1} parent=0 // loop_body
    %s17 = ssub.s32 %s12, 1
    %s18 = ssub.s32 %s12, 2
    %s19 = sadd.s32 %s12, 1
    %s20 = ssub.s32 %s12, %s19
    %p21 = scmp.eq.s32.totalorder %s20, 0
    %s23 = sadd.s32 %s22, 1
    %s24 = scalar_select %p21, %s22, %s23
    %p27 = pneg %p21
    %p28 = scmp.eq.s32.totalorder %s12, 1
    %p29 = por %p27, %p28
    %p30 = scmp.ne.s32.totalorder %s22, %s25
    %p31 = scmp.eq.s32.totalorder %s12, 0
    %p32 = por %p30, %p31
    %p33 = scmp.ne.s32.totalorder %s22, %s25
    %p34 = scmp.eq.s32.totalorder %s17, 1
    %p35 = por %p33, %p34
    %p36 = scmp.ne.s32.totalorder %s25, %s26
    %p37 = scmp.eq.s32.totalorder %s17, 0
    %p38 = por %p36, %p37
    %p39 = scmp.ne.s32.totalorder %s25, %s26
    %p40 = scmp.eq.s32.totalorder %s18, 1
    %p41 = por %p39, %p40
    %p43 = scmp.ne.s32.totalorder %s26, %s42
    %p44 = scmp.eq.s32.totalorder %s18, 0
    %p45 = por %p43, %p44
    %s47 = sadd.s32 %s46, 1
    %p50 = scmp.eq.s32.totalorder %s12, 1
    %p51 = scmp.ne.s32.totalorder %s46, %s48
    %p52 = scmp.eq.s32.totalorder %s12, 0
    %p53 = por %p51, %p52
    %p54 = scmp.ne.s32.totalorder %s46, %s48
    %p55 = scmp.eq.s32.totalorder %s17, 1
    %p56 = por %p54, %p55
    %p57 = scmp.ne.s32.totalorder %s48, %s49
    %p58 = scmp.eq.s32.totalorder %s17, 0
    %p59 = por %p57, %p58
    %p60 = scmp.ne.s32.totalorder %s48, %s49
    %p61 = scmp.eq.s32.totalorder %s18, 1
    %p62 = por %p60, %p61
    %p64 = scmp.ne.s32.totalorder %s49, %s63
    %p65 = scmp.eq.s32.totalorder %s18, 0
    %p66 = por %p64, %p65
    %s68 = sadd.s32 %s67, 1
    %p71 = scmp.eq.s32.totalorder %s12, 1
    %p72 = scmp.ne.s32.totalorder %s67, %s69
    %p73 = scmp.eq.s32.totalorder %s12, 0
    %p74 = por %p72, %p73
    %p75 = scmp.ne.s32.totalorder %s67, %s69
    %p76 = scmp.eq.s32.totalorder %s17, 1
    %p77 = por %p75, %p76
    %p78 = scmp.ne.s32.totalorder %s69, %s70
    %p79 = scmp.eq.s32.totalorder %s17, 0
    %p80 = por %p78, %p79
    %p81 = scmp.ne.s32.totalorder %s69, %s70
    %p82 = scmp.eq.s32.totalorder %s18, 1
    %p83 = por %p81, %p82
    %p85 = scmp.ne.s32.totalorder %s70, %s84
    %p86 = scmp.eq.s32.totalorder %s18, 0
    %p87 = por %p85, %p86
    %s89 = sadd.s32 %s88, 1
    %p92 = scmp.eq.s32.totalorder %s12, 1
    %p93 = scmp.ne.s32.totalorder %s88, %s90
    %p94 = scmp.eq.s32.totalorder %s12, 0
    %p95 = por %p93, %p94
    %p96 = scmp.ne.s32.totalorder %s88, %s90
    %p97 = scmp.eq.s32.totalorder %s17, 1
    %p98 = por %p96, %p97
    %p99 = scmp.ne.s32.totalorder %s90, %s91
    %p100 = scmp.eq.s32.totalorder %s17, 0
    %p101 = por %p99, %p100
    %p102 = scmp.ne.s32.totalorder %s90, %s91
    %p103 = scmp.eq.s32.totalorder %s18, 1
    %p104 = por %p102, %p103
    %p106 = scmp.ne.s32.totalorder %s91, %s105
    %p107 = scmp.eq.s32.totalorder %s18, 0
    %p108 = por %p106, %p107
    %s110 = sadd.s32 %s109, 1
    %p113 = scmp.eq.s32.totalorder %s12, 1
    %p114 = scmp.ne.s32.totalorder %s109, %s111
    %p115 = scmp.eq.s32.totalorder %s12, 0
    %p116 = por %p114, %p115
    %p117 = scmp.ne.s32.totalorder %s109, %s111
    %p118 = scmp.eq.s32.totalorder %s17, 1
    %p119 = por %p117, %p118
    %p120 = scmp.ne.s32.totalorder %s111, %s112
    %p121 = scmp.eq.s32.totalorder %s17, 0
    %p122 = por %p120, %p121
    %p123 = scmp.ne.s32.totalorder %s111, %s112
    %p124 = scmp.eq.s32.totalorder %s18, 1
    %p125 = por %p123, %p124
    %p127 = scmp.ne.s32.totalorder %s112, %s126
    %p128 = scmp.eq.s32.totalorder %s18, 0
    %p129 = por %p127, %p128
    %s131 = sadd.s32 %s130, 1
    %p134 = scmp.eq.s32.totalorder %s12, 1
    %p135 = scmp.ne.s32.totalorder %s130, %s132
    %p136 = scmp.eq.s32.totalorder %s12, 0
    %p137 = por %p135, %p136
    %p138 = scmp.ne.s32.totalorder %s130, %s132
    %p139 = scmp.eq.s32.totalorder %s17, 1
    %p140 = por %p138, %p139
    %p141 = scmp.ne.s32.totalorder %s132, %s133
    %p142 = scmp.eq.s32.totalorder %s17, 0
    %p143 = por %p141, %p142
    %p144 = scmp.ne.s32.totalorder %s132, %s133
    %p145 = scmp.eq.s32.totalorder %s18, 1
    %p146 = por %p144, %p145
    %p148 = scmp.ne.s32.totalorder %s133, %s147
    %p149 = scmp.eq.s32.totalorder %s18, 0
    %p150 = por %p148, %p149
    %s151 = ssub.s32 %s12, %s19
    %p152 = scmp.eq.s32.totalorder %s151, 0
    %s154 = sadd.s32 %s153, 1
    %s155 = scalar_select %p152, %s153, %s154
    %p158 = pneg %p152
    %p159 = scmp.eq.s32.totalorder %s12, 1
    %p160 = por %p158, %p159
    %p161 = scmp.ne.s32.totalorder %s153, %s156
    %p162 = scmp.eq.s32.totalorder %s12, 0
    %p163 = por %p161, %p162
    %p164 = scmp.ne.s32.totalorder %s153, %s156
    %p165 = scmp.eq.s32.totalorder %s17, 1
    %p166 = por %p164, %p165
    %p167 = scmp.ne.s32.totalorder %s156, %s157
    %p168 = scmp.eq.s32.totalorder %s17, 0
    %p169 = por %p167, %p168
    %p170 = scmp.ne.s32.totalorder %s156, %s157
    %p171 = scmp.eq.s32.totalorder %s18, 1
    %p172 = por %p170, %p171
    %p174 = scmp.ne.s32.totalorder %s157, %s173
    %p175 = scmp.eq.s32.totalorder %s18, 0
    %p176 = por %p174, %p175
    %p177 = scmp.le.s32.totalorder 1, %s12
    %p178 = scmp.lt.s32.totalorder %s12, 3
    %p179 = pnand %p177, %p178
    %p180 = pneg %p179
    // Predicated region
    $region9: #{tpu_custom_call.1} parent=5 // pred_check
      _
    $region10: #{tpu_custom_call.1} parent=5 // pred_check_branch
      %182 = sbr.rel (%p179) target = $region12
    $region11: #{tpu_custom_call.1} parent=5 // pred_region
      %s183 = ssub.s32 %s12, 1
      // Predicated region
      $region13: #{tpu_custom_call.1} parent=11 // pred_check
        %p184 = pneg %p59
      $region14: #{tpu_custom_call.1} parent=11 // pred_check_branch
        %186 = sbr.rel (%p184) target = $region16
      $region15: #{tpu_custom_call.1} parent=11 // pred_region
        _
      $region16: #{tpu_custom_call.1} parent=11 // pred_fallthru
        _
      // Predicated region
      $region17: #{tpu_custom_call.1} parent=11 // pred_check
        %p187 = pneg %p80
      $region18: #{tpu_custom_call.1} parent=11 // pred_check_branch
        %189 = sbr.rel (%p187) target = $region20
      $region19: #{tpu_custom_call.1} parent=11 // pred_region
        _
      $region20: #{tpu_custom_call.1} parent=11 // pred_fallthru
        _
      // Predicated region
      $region21: #{tpu_custom_call.1} parent=11 // pred_check
        %p190 = pneg %p101
      $region22: #{tpu_custom_call.1} parent=11 // pred_check_branch
        %192 = sbr.rel (%p190) target = $region24
      $region23: #{tpu_custom_call.1} parent=11 // pred_region
        _
      $region24: #{tpu_custom_call.1} parent=11 // pred_fallthru
        _
      // Predicated region
      $region25: #{tpu_custom_call.1} parent=11 // pred_check
        %p193 = pneg %p122
      $region26: #{tpu_custom_call.1} parent=11 // pred_check_branch
        %195 = sbr.rel (%p193) target = $region28
      $region27: #{tpu_custom_call.1} parent=11 // pred_region
        _
      $region28: #{tpu_custom_call.1} parent=11 // pred_fallthru
        _
      // Predicated region
      $region29: #{tpu_custom_call.1} parent=11 // pred_check
        %p196 = pneg %p143
      $region30: #{tpu_custom_call.1} parent=11 // pred_check_branch
        %198 = sbr.rel (%p196) target = $region32
      $region31: #{tpu_custom_call.1} parent=11 // pred_region
        _
      $region32: #{tpu_custom_call.1} parent=11 // pred_fallthru
        _
    $region12: #{tpu_custom_call.1} parent=5 // pred_fallthru
      _
    %p199 = scmp.lt.s32.totalorder %s12, 2
    // Predicated region
    $region33: #{tpu_custom_call.1} parent=5 // pred_check
      %p200 = pneg %p199
    $region34: #{tpu_custom_call.1} parent=5 // pred_check_branch
      %202 = sbr.rel (%p200) target = $region36
    $region35: #{tpu_custom_call.1} parent=5 // pred_region
      // Predicated region
      $region37: #{tpu_custom_call.1} parent=35 // pred_check
        %p203 = pneg %p32
      $region38: #{tpu_custom_call.1} parent=35 // pred_check_branch
        %205 = sbr.rel (%p203) target = $region40
      $region39: #{tpu_custom_call.1} parent=35 // pred_region
        %s206 = smul.u32 16, %s12
        %p207 = scmp.lt.s32.totalorder %s206, 31
        %s208 = scalar_select %p207, %s206, 31
        %s209 = smul.addr %s208, 2
        %s210 = smul.addr %s209, 4
        %s211 = scalar_lea.vmem %s0, %s210
        %s212 = smul.u32 16, %s12
      $region40: #{tpu_custom_call.1} parent=35 // pred_fallthru
        _
    $region36: #{tpu_custom_call.1} parent=5 // pred_fallthru
      _
    %p213 = scmp.le.s32.totalorder 1, %s12
    %p214 = scmp.lt.s32.totalorder %s12, 3
    %p215 = pnand %p213, %p214
    %p216 = pneg %p215
    // Predicated region
    $region41: #{tpu_custom_call.1} parent=5 // pred_check
      _
    $region42: #{tpu_custom_call.1} parent=5 // pred_check_branch
      %218 = sbr.rel (%p215) target = $region44
    $region43: #{tpu_custom_call.1} parent=5 // pred_region
      %s219 = ssub.s32 %s12, 1
      %s220 = smul.u32 16, %s17
      %p221 = scmp.lt.s32.totalorder %s220, 31
      %s222 = scalar_select %p221, %s220, 31
      %s223 = smul.addr %s222, 2
      %s224 = smul.addr %s223, 4
      %s225 = scalar_lea.vmem %s0, %s224
      %p226 = pneg %p38
      %p227 = pneg %p35
      %p228 = pneg %p59
      %p229 = pneg %p56
      %p230 = pneg %p80
      %p231 = pneg %p77
      %p232 = pneg %p101
      %p233 = pneg %p98
      %p234 = pneg %p122
      %p235 = pneg %p119
      %p236 = pneg %p143
      %p237 = pneg %p140
      %p238 = pneg %p169
      %p239 = pneg %p166
      %s240 = smul.u32 16, %s17
      %p241 = scmp.lt.s32.totalorder %s240, 31
      %s242 = scalar_select %p241, %s240, 31
      %s243 = smul.addr %s242, 4
      %s244 = scalar_lea.vmem %s6, %s243
      %s245 = smul.u32 16, %s17
      %p246 = scmp.lt.s32.totalorder %s245, 31
      %s247 = scalar_select %p246, %s245, 31
      %s248 = smul.addr %s247, 2
      %s249 = smul.addr %s248, 4
      %s250 = scalar_lea.vmem %s0, %s249
      %s251 = smul.u32 16, %s17
      %s252 = smul.u32 16, %s17
      %p253 = scmp.lt.s32.totalorder %s252, 31
      %s254 = scalar_select %p253, %s252, 31
      %s255 = smul.addr %s254, 4
      %s256 = scalar_lea.vmem %s6, %s255
      %s257 = smul.u32 16, %s17
      %v259 = vld [vmem:[%s1] sm:$0xff]
      %v260 = vld [vmem:[%s1 + $0x8] sm:$0xff]
      %v261 = vld [vmem:[%s1 + $0x10] sm:$0xff]
      %v262 = vld [vmem:[%s1 + $0x18] sm:$0xff]
      %v263 = vld [vmem:[%s1 + $0x20] sm:$0xff]
      %v264 = vld [vmem:[%s1 + $0x28] sm:$0xff]
      %v265 = vld [vmem:[%s1 + $0x30] sm:$0xff]
      %v266 = vld [vmem:[%s1 + $0x38] sm:$0xff]
      %v267 = vld [vmem:[%s1 + $0x40] sm:$0xff]
      %v268 = vld [vmem:[%s1 + $0x48] sm:$0xff]
      %v269 = vld [vmem:[%s1 + $0x50] sm:$0xff]
      %v270 = vld [vmem:[%s1 + $0x58] sm:$0xff]
      %v271 = vld [vmem:[%s1 + $0x60] sm:$0xff]
      %v272 = vld [vmem:[%s1 + $0x68] sm:$0xff]
      %v273 = vld [vmem:[%s1 + $0x70] sm:$0xff]
      %v274 = vld [vmem:[%s1 + $0x78] sm:$0xff]
      %v275 = vld [vmem:[%s1 + $0x80] sm:$0xff]
      %v276 = vld [vmem:[%s1 + $0x88] sm:$0xff]
      %v277 = vld [vmem:[%s1 + $0x90] sm:$0xff]
      %v278 = vld [vmem:[%s1 + $0x98] sm:$0xff]
      %v279 = vld [vmem:[%s1 + $0xa0] sm:$0xff]
      %v280 = vld [vmem:[%s1 + $0xa8] sm:$0xff]
      %v281 = vld [vmem:[%s1 + $0xb0] sm:$0xff]
      %v282 = vld [vmem:[%s1 + $0xb8] sm:$0xff]
      %v283 = vld [vmem:[%s1 + $0xc0] sm:$0xff]
      %v284 = vld [vmem:[%s1 + $0xc8] sm:$0xff]
      %v285 = vld [vmem:[%s1 + $0xd0] sm:$0xff]
      %v286 = vld [vmem:[%s1 + $0xd8] sm:$0xff]
      %v287 = vld [vmem:[%s1 + $0xe0] sm:$0xff]
      %v288 = vld [vmem:[%s1 + $0xe8] sm:$0xff]
      %v289 = vld [vmem:[%s1 + $0xf0] sm:$0xff]
      %v290 = vld [vmem:[%s1 + $0xf8] sm:$0xff]
      %v291 = vld [vmem:[%s2] sm:$0xff]
      %v292 = vld [vmem:[%s2 + $0x8] sm:$0xff]
      %v293 = vld [vmem:[%s2 + $0x10] sm:$0xff]
      %v294 = vld [vmem:[%s2 + $0x18] sm:$0xff]
      %v295 = vld [vmem:[%s2 + $0x20] sm:$0xff]
      %v296 = vld [vmem:[%s2 + $0x28] sm:$0xff]
      %v297 = vld [vmem:[%s2 + $0x30] sm:$0xff]
      %v298 = vld [vmem:[%s2 + $0x38] sm:$0xff]
      %v299 = vld [vmem:[%s3] sm:$0x1]
      %v301 = vlaneseq
      %v302 = vshrl.u32 %v301, 7
      %v303 = vsub.s32 0, %v302
      %v304 = vrot.slane %v299, %v303
      %vm306 = vcmask 523264
      %v308 = vsel %vm306, %v259, 0
      %v311 = vsel %vm306, %v260, 0
      %v314 = vsel %vm306, %v261, 0
      %v317 = vsel %vm306, %v262, 0
      %v320 = vsel %vm306, %v263, 0
      %v323 = vsel %vm306, %v264, 0
      %v326 = vsel %vm306, %v265, 0
      %v329 = vsel %vm306, %v266, 0
      %v332 = vsel %vm306, %v267, 0
      %v335 = vsel %vm306, %v268, 0
      %v338 = vsel %vm306, %v269, 0
      %v341 = vsel %vm306, %v270, 0
      %v344 = vsel %vm306, %v271, 0
      %v347 = vsel %vm306, %v272, 0
      %v350 = vsel %vm306, %v273, 0
      %v353 = vsel %vm306, %v274, 0
      %v356 = vsel %vm306, %v275, 0
      %v359 = vsel %vm306, %v276, 0
      %v362 = vsel %vm306, %v277, 0
      %v365 = vsel %vm306, %v278, 0
      %v368 = vsel %vm306, %v279, 0
      %v371 = vsel %vm306, %v280, 0
      %v374 = vsel %vm306, %v281, 0
      %v377 = vsel %vm306, %v282, 0
      %v380 = vsel %vm306, %v283, 0
      %v383 = vsel %vm306, %v284, 0
      %v386 = vsel %vm306, %v285, 0
      %v389 = vsel %vm306, %v286, 0
      %v392 = vsel %vm306, %v287, 0
      %v395 = vsel %vm306, %v288, 0
      %v398 = vsel %vm306, %v289, 0
      %v401 = vsel %vm306, %v290, 0
      %403 = vmatprep.subr.mxu0 0.0
      %404 = vmatpush1.msra.mxu0 0.0
      %405 = vmatprep.subr.mxu0 0.0
      %406 = vmatpush1.msra.mxu0 0.0
      %407 = vmatprep.subr.mxu0 0.0
      %408 = vmatpush1.msra.mxu0 0.0
      %409 = vmatprep.subr.mxu0 0.0
      %410 = vmatpush1.msra.mxu0 0.0
      %411 = vmatprep.subr.mxu0 0.0
      %412 = vmatpush1.msra.mxu0 0.0
      %413 = vmatprep.subr.mxu0 0.0
      %414 = vmatpush1.msra.mxu0 0.0
      %415 = vmatprep.subr.mxu0 0.0
      %416 = vmatpush1.msra.mxu0 0.0
      %417 = vmatprep.subr.mxu0 0.0
      %418 = vmatpush1.msra.mxu0 0.0
      %419 = vmatprep.subr.mxu0 0.0
      %420 = vmatpush1.msra.mxu0 %v298
      %421 = vmatprep.subr.mxu0 0.0
      %422 = vmatpush1.msra.mxu0 %v297
      %423 = vmatprep.subr.mxu0 0.0
      %424 = vmatpush1.msra.mxu0 %v296
      %425 = vmatprep.subr.mxu0 0.0
      %426 = vmatpush1.msra.mxu0 %v295
      %427 = vmatprep.subr.mxu0 0.0
      %428 = vmatpush1.msra.mxu0 %v294
      %429 = vmatprep.subr.mxu0 0.0
      %430 = vmatpush1.msra.mxu0 %v293
      %431 = vmatprep.subr.mxu0 0.0
      %432 = vmatpush1.msra.mxu0 %v292
      %433 = vmatprep.subr.mxu0 0.0
      %434 = vmatpush1.msra.mxu0 %v291
      %435 = vmatprep.subr.mxu0 0.0
      %436 = vmatpush2.msra.mxu0 0.0
      %437 = vmatprep.subr.mxu0 0.0
      %438 = vmatpush2.msra.mxu0 0.0
      %439 = vmatprep.subr.mxu0 0.0
      %440 = vmatpush2.msra.mxu0 0.0
      %441 = vmatprep.subr.mxu0 0.0
      %442 = vmatpush2.msra.mxu0 0.0
      %443 = vmatprep.subr.mxu0 0.0
      %444 = vmatpush2.msra.mxu0 0.0
      %445 = vmatprep.subr.mxu0 0.0
      %446 = vmatpush2.msra.mxu0 0.0
      %447 = vmatprep.subr.mxu0 0.0
      %448 = vmatpush2.msra.mxu0 0.0
      %449 = vmatprep.subr.mxu0 0.0
      %450 = vmatpush2.msra.mxu0 0.0
      %451 = vmatprep.subr.mxu0 0.0
      %452 = vmatpush2.msra.mxu0 0.0
      %453 = vmatprep.subr.mxu0 0.0
      %454 = vmatpush2.msra.mxu0 0.0
      %455 = vmatprep.subr.mxu0 0.0
      %456 = vmatpush2.msra.mxu0 0.0
      %457 = vmatprep.subr.mxu0 0.0
      %458 = vmatpush2.msra.mxu0 0.0
      %459 = vmatprep.subr.mxu0 0.0
      %460 = vmatpush2.msra.mxu0 0.0
      %461 = vmatprep.subr.mxu0 0.0
      %462 = vmatpush2.msra.mxu0 0.0
      %463 = vmatprep.subr.mxu0 0.0
      %464 = vmatpush2.msra.mxu0 0.0
      %465 = vmatprep.subr.mxu0 0.0
      %466 = vmatpush2.msra.mxu0 0.0
      %467 = vmatprep.mubr.f32.mxu0 0.0
      %468 = vmatmul.mubr.f32.gmra.mxu0 %v308
      %v469 = vpop.f32.mrf.mxu0
      %v470 = vadd.f32 %v304, %v469
      %v471 = vpop.f32.mrf.mxu0
      %472 = vmatprep.mubr.f32.mxu0 0.0
      %473 = vmatmul.mubr.f32.gmra.mxu0 %v311
      %v474 = vpop.f32.mrf.mxu0
      %v475 = vadd.f32 %v304, %v474
      %v476 = vpop.f32.mrf.mxu0
      %477 = vmatprep.mubr.f32.mxu0 0.0
      %478 = vmatmul.mubr.f32.gmra.mxu0 %v314
      %v479 = vpop.f32.mrf.mxu0
      %v480 = vadd.f32 %v304, %v479
      %v481 = vpop.f32.mrf.mxu0
      %482 = vmatprep.mubr.f32.mxu0 0.0
      %483 = vmatmul.mubr.f32.gmra.mxu0 %v317
      %v484 = vpop.f32.mrf.mxu0
      %v485 = vadd.f32 %v304, %v484
      %v486 = vpop.f32.mrf.mxu0
      %487 = vmatprep.mubr.f32.mxu0 0.0
      %488 = vmatmul.mubr.f32.gmra.mxu0 %v320
      %v489 = vpop.f32.mrf.mxu0
      %v490 = vadd.f32 %v304, %v489
      %v491 = vpop.f32.mrf.mxu0
      %492 = vmatprep.mubr.f32.mxu0 0.0
      %493 = vmatmul.mubr.f32.gmra.mxu0 %v323
      %v494 = vpop.f32.mrf.mxu0
      %v495 = vadd.f32 %v304, %v494
      %v496 = vpop.f32.mrf.mxu0
      %497 = vmatprep.mubr.f32.mxu0 0.0
      %498 = vmatmul.mubr.f32.gmra.mxu0 %v326
      %v499 = vpop.f32.mrf.mxu0
      %v500 = vadd.f32 %v304, %v499
      %v501 = vpop.f32.mrf.mxu0
      %502 = vmatprep.mubr.f32.mxu0 0.0
      %503 = vmatmul.mubr.f32.gmra.mxu0 %v329
      %v504 = vpop.f32.mrf.mxu0
      %v505 = vadd.f32 %v304, %v504
      %v506 = vpop.f32.mrf.mxu0
      %507 = vmatprep.mubr.f32.mxu0 0.0
      %508 = vmatmul.mubr.f32.gmra.mxu0 %v332
      %v509 = vpop.f32.mrf.mxu0
      %v510 = vadd.f32 %v304, %v509
      %v511 = vpop.f32.mrf.mxu0
      %512 = vmatprep.mubr.f32.mxu0 0.0
      %513 = vmatmul.mubr.f32.gmra.mxu0 %v335
      %v514 = vpop.f32.mrf.mxu0
      %v515 = vadd.f32 %v304, %v514
      %v516 = vpop.f32.mrf.mxu0
      %517 = vmatprep.mubr.f32.mxu0 0.0
      %518 = vmatmul.mubr.f32.gmra.mxu0 %v338
      %v519 = vpop.f32.mrf.mxu0
      %v520 = vadd.f32 %v304, %v519
      %v521 = vpop.f32.mrf.mxu0
      %522 = vmatprep.mubr.f32.mxu0 0.0
      %523 = vmatmul.mubr.f32.gmra.mxu0 %v341
      %v524 = vpop.f32.mrf.mxu0
      %v525 = vadd.f32 %v304, %v524
      %v526 = vpop.f32.mrf.mxu0
      %527 = vmatprep.mubr.f32.mxu0 0.0
      %528 = vmatmul.mubr.f32.gmra.mxu0 %v344
      %v529 = vpop.f32.mrf.mxu0
      %v530 = vadd.f32 %v304, %v529
      %v531 = vpop.f32.mrf.mxu0
      %532 = vmatprep.mubr.f32.mxu0 0.0
      %533 = vmatmul.mubr.f32.gmra.mxu0 %v347
      %v534 = vpop.f32.mrf.mxu0
      %v535 = vadd.f32 %v304, %v534
      %v536 = vpop.f32.mrf.mxu0
      %537 = vmatprep.mubr.f32.mxu0 0.0
      %538 = vmatmul.mubr.f32.gmra.mxu0 %v350
      %v539 = vpop.f32.mrf.mxu0
      %v540 = vadd.f32 %v304, %v539
      %v541 = vpop.f32.mrf.mxu0
      %542 = vmatprep.mubr.f32.mxu0 0.0
      %543 = vmatmul.mubr.f32.gmra.mxu0 %v353
      %v544 = vpop.f32.mrf.mxu0
      %v545 = vadd.f32 %v304, %v544
      %v546 = vpop.f32.mrf.mxu0
      %547 = vmatprep.mubr.f32.mxu0 0.0
      %548 = vmatmul.mubr.f32.gmra.mxu0 %v356
      %v549 = vpop.f32.mrf.mxu0
      %v550 = vadd.f32 %v304, %v549
      %v551 = vpop.f32.mrf.mxu0
      %552 = vmatprep.mubr.f32.mxu0 0.0
      %553 = vmatmul.mubr.f32.gmra.mxu0 %v359
      %v554 = vpop.f32.mrf.mxu0
      %v555 = vadd.f32 %v304, %v554
      %v556 = vpop.f32.mrf.mxu0
      %557 = vmatprep.mubr.f32.mxu0 0.0
      %558 = vmatmul.mubr.f32.gmra.mxu0 %v362
      %v559 = vpop.f32.mrf.mxu0
      %v560 = vadd.f32 %v304, %v559
      %v561 = vpop.f32.mrf.mxu0
      %562 = vmatprep.mubr.f32.mxu0 0.0
      %563 = vmatmul.mubr.f32.gmra.mxu0 %v365
      %v564 = vpop.f32.mrf.mxu0
      %v565 = vadd.f32 %v304, %v564
      %v566 = vpop.f32.mrf.mxu0
      %567 = vmatprep.mubr.f32.mxu0 0.0
      %568 = vmatmul.mubr.f32.gmra.mxu0 %v368
      %v569 = vpop.f32.mrf.mxu0
      %v570 = vadd.f32 %v304, %v569
      %v571 = vpop.f32.mrf.mxu0
      %572 = vmatprep.mubr.f32.mxu0 0.0
      %573 = vmatmul.mubr.f32.gmra.mxu0 %v371
      %v574 = vpop.f32.mrf.mxu0
      %v575 = vadd.f32 %v304, %v574
      %v576 = vpop.f32.mrf.mxu0
      %577 = vmatprep.mubr.f32.mxu0 0.0
      %578 = vmatmul.mubr.f32.gmra.mxu0 %v374
      %v579 = vpop.f32.mrf.mxu0
      %v580 = vadd.f32 %v304, %v579
      %v581 = vpop.f32.mrf.mxu0
      %582 = vmatprep.mubr.f32.mxu0 0.0
      %583 = vmatmul.mubr.f32.gmra.mxu0 %v377
      %v584 = vpop.f32.mrf.mxu0
      %v585 = vadd.f32 %v304, %v584
      %v586 = vpop.f32.mrf.mxu0
      %587 = vmatprep.mubr.f32.mxu0 0.0
      %588 = vmatmul.mubr.f32.gmra.mxu0 %v380
      %v589 = vpop.f32.mrf.mxu0
      %v590 = vadd.f32 %v304, %v589
      %v591 = vpop.f32.mrf.mxu0
      %592 = vmatprep.mubr.f32.mxu0 0.0
      %593 = vmatmul.mubr.f32.gmra.mxu0 %v383
      %v594 = vpop.f32.mrf.mxu0
      %v595 = vadd.f32 %v304, %v594
      %v596 = vpop.f32.mrf.mxu0
      %597 = vmatprep.mubr.f32.mxu0 0.0
      %598 = vmatmul.mubr.f32.gmra.mxu0 %v386
      %v599 = vpop.f32.mrf.mxu0
      %v600 = vadd.f32 %v304, %v599
      %v601 = vpop.f32.mrf.mxu0
      %602 = vmatprep.mubr.f32.mxu0 0.0
      %603 = vmatmul.mubr.f32.gmra.mxu0 %v389
      %v604 = vpop.f32.mrf.mxu0
      %v605 = vadd.f32 %v304, %v604
      %v606 = vpop.f32.mrf.mxu0
      %607 = vmatprep.mubr.f32.mxu0 0.0
      %608 = vmatmul.mubr.f32.gmra.mxu0 %v392
      %v609 = vpop.f32.mrf.mxu0
      %v610 = vadd.f32 %v304, %v609
      %v611 = vpop.f32.mrf.mxu0
      %612 = vmatprep.mubr.f32.mxu0 0.0
      %613 = vmatmul.mubr.f32.gmra.mxu0 %v395
      %v614 = vpop.f32.mrf.mxu0
      %v615 = vadd.f32 %v304, %v614
      %v616 = vpop.f32.mrf.mxu0
      %617 = vmatprep.mubr.f32.mxu0 0.0
      %618 = vmatmul.mubr.f32.gmra.mxu0 %v398
      %v619 = vpop.f32.mrf.mxu0
      %v620 = vadd.f32 %v304, %v619
      %v621 = vpop.f32.mrf.mxu0
      %622 = vmatprep.mubr.f32.mxu0 0.0
      %623 = vmatmul.mubr.f32.gmra.mxu0 %v401
      %v624 = vpop.f32.mrf.mxu0
      %v625 = vadd.f32 %v304, %v624
      %v626 = vpop.f32.mrf.mxu0
      %627 = vdwg.mxu0
      %v628 = vld [vmem:[%s250] sm:$0xff]
      %v629 = vld [vmem:[%s250 + $0x8] sm:$0xff]
      %v630 = vld [vmem:[%s250 + $0x10] sm:$0xff]
      %v631 = vld [vmem:[%s250 + $0x18] sm:$0xff]
      %v632 = vld [vmem:[%s250 + $0x20] sm:$0xff]
      %v633 = vld [vmem:[%s250 + $0x28] sm:$0xff]
      %v634 = vld [vmem:[%s250 + $0x30] sm:$0xff]
      %v635 = vld [vmem:[%s250 + $0x38] sm:$0xff]
      %v636 = vld [vmem:[%s250 + $0x40] sm:$0xff]
      %v637 = vld [vmem:[%s250 + $0x48] sm:$0xff]
      %v638 = vld [vmem:[%s250 + $0x50] sm:$0xff]
      %v639 = vld [vmem:[%s250 + $0x58] sm:$0xff]
      %v640 = vld [vmem:[%s250 + $0x60] sm:$0xff]
      %v641 = vld [vmem:[%s250 + $0x68] sm:$0xff]
      %v642 = vld [vmem:[%s250 + $0x70] sm:$0xff]
      %v643 = vld [vmem:[%s250 + $0x78] sm:$0xff]
      %v644 = vpack.c.bf16 %v475, %v470
      %v645 = vpack.c.bf16 %v485, %v480
      %v646 = vpack.c.bf16 %v495, %v490
      %v647 = vpack.c.bf16 %v505, %v500
      %v648 = vpack.c.bf16 %v515, %v510
      %v649 = vpack.c.bf16 %v525, %v520
      %v650 = vpack.c.bf16 %v535, %v530
      %v651 = vpack.c.bf16 %v545, %v540
      %v652 = vpack.c.bf16 %v555, %v550
      %v653 = vpack.c.bf16 %v565, %v560
      %v654 = vpack.c.bf16 %v575, %v570
      %v655 = vpack.c.bf16 %v585, %v580
      %v656 = vpack.c.bf16 %v595, %v590
      %v657 = vpack.c.bf16 %v605, %v600
      %v658 = vpack.c.bf16 %v615, %v610
      %v659 = vpack.c.bf16 %v625, %v620
      %v676 = vunpack.c.l.b16 %v628
      %v677 = vunpack.c.h.b16 %v628
      %v678 = vunpack.c.l.b16 %v629
      %v679 = vunpack.c.h.b16 %v629
      %v680 = vunpack.c.l.b16 %v630
      %v681 = vunpack.c.h.b16 %v630
      %v682 = vunpack.c.l.b16 %v631
      %v683 = vunpack.c.h.b16 %v631
      %v684 = vunpack.c.l.b16 %v632
      %v685 = vunpack.c.h.b16 %v632
      %v686 = vunpack.c.l.b16 %v633
      %v687 = vunpack.c.h.b16 %v633
      %v688 = vunpack.c.l.b16 %v634
      %v689 = vunpack.c.h.b16 %v634
      %v690 = vunpack.c.l.b16 %v635
      %v691 = vunpack.c.h.b16 %v635
      %v692 = vunpack.c.l.b16 %v636
      %v693 = vunpack.c.h.b16 %v636
      %v694 = vunpack.c.l.b16 %v637
      %v695 = vunpack.c.h.b16 %v637
      %v696 = vunpack.c.l.b16 %v638
      %v697 = vunpack.c.h.b16 %v638
      %v698 = vunpack.c.l.b16 %v639
      %v699 = vunpack.c.h.b16 %v639
      %v700 = vunpack.c.l.b16 %v640
      %v701 = vunpack.c.h.b16 %v640
      %v702 = vunpack.c.l.b16 %v641
      %v703 = vunpack.c.h.b16 %v641
      %v704 = vunpack.c.l.b16 %v642
      %v705 = vunpack.c.h.b16 %v642
      %v706 = vunpack.c.l.b16 %v643
      %v707 = vunpack.c.h.b16 %v643
      %v708 = vpack.c.b16 %v678, %v676
      %v709 = vpack.c.b16 %v679, %v677
      %v710 = vpack.c.b16 %v682, %v680
      %v711 = vpack.c.b16 %v683, %v681
      %v712 = vpack.c.b16 %v686, %v684
      %v713 = vpack.c.b16 %v687, %v685
      %v714 = vpack.c.b16 %v690, %v688
      %v715 = vpack.c.b16 %v691, %v689
      %v716 = vpack.c.b16 %v694, %v692
      %v717 = vpack.c.b16 %v695, %v693
      %v718 = vpack.c.b16 %v698, %v696
      %v719 = vpack.c.b16 %v699, %v697
      %v720 = vpack.c.b16 %v702, %v700
      %v721 = vpack.c.b16 %v703, %v701
      %v722 = vpack.c.b16 %v706, %v704
      %v723 = vpack.c.b16 %v707, %v705
      %740 = vmatprep.subr.bf16.mxu0 0
      %741 = vmatpush1.bf16.msra.mxu0 %v651
      %742 = vmatprep.subr.bf16.mxu0 0
      %743 = vmatpush1.bf16.msra.mxu0 %v650
      %744 = vmatprep.subr.bf16.mxu0 0
      %745 = vmatpush1.bf16.msra.mxu0 %v649
      %746 = vmatprep.subr.bf16.mxu0 0
      %747 = vmatpush1.bf16.msra.mxu0 %v648
      %748 = vmatprep.subr.bf16.mxu0 0
      %749 = vmatpush1.bf16.msra.mxu0 %v647
      %750 = vmatprep.subr.bf16.mxu0 0
      %751 = vmatpush1.bf16.msra.mxu0 %v646
      %752 = vmatprep.subr.bf16.mxu0 0
      %753 = vmatpush1.bf16.msra.mxu0 %v645
      %754 = vmatprep.subr.bf16.mxu0 0
      %755 = vmatpush1.bf16.msra.mxu0 %v644
      %756 = vmatprep.subr.bf16.mxu0 0
      %757 = vmatpush2.bf16.msra.mxu0 %v659
      %758 = vmatprep.subr.bf16.mxu0 0
      %759 = vmatpush2.bf16.msra.mxu0 %v658
      %760 = vmatprep.subr.bf16.mxu0 0
      %761 = vmatpush2.bf16.msra.mxu0 %v657
      %762 = vmatprep.subr.bf16.mxu0 0
      %763 = vmatpush2.bf16.msra.mxu0 %v656
      %764 = vmatprep.subr.bf16.mxu0 0
      %765 = vmatpush2.bf16.msra.mxu0 %v655
      %766 = vmatprep.subr.bf16.mxu0 0
      %767 = vmatpush2.bf16.msra.mxu0 %v654
      %768 = vmatprep.subr.bf16.mxu0 0
      %769 = vmatpush2.bf16.msra.mxu0 %v653
      %770 = vmatprep.subr.bf16.mxu0 0
      %771 = vmatpush2.bf16.msra.mxu0 %v652
      %772 = vmatprep.mubr.bf16.mxu0 %v709
      %773 = vmatmul.mubr.bf16.gmra.mxu0 %v708
      %v774 = vpop.f32.mrf.mxu0
      %v775 = vadd.f32 0.0, %v774
      %v776 = vpop.f32.mrf.mxu0
      %v777 = vpop.f32.mrf.mxu0
      %v778 = vadd.f32 0.0, %v777
      %v779 = vpop.f32.mrf.mxu0
      %780 = vmatprep.mubr.bf16.mxu0 %v711
      %781 = vmatmul.mubr.bf16.gmra.mxu0 %v710
      %v782 = vpop.f32.mrf.mxu0
      %v783 = vadd.f32 0.0, %v782
      %v784 = vpop.f32.mrf.mxu0
      %v785 = vpop.f32.mrf.mxu0
      %v786 = vadd.f32 0.0, %v785
      %v787 = vpop.f32.mrf.mxu0
      %788 = vmatprep.mubr.bf16.mxu0 %v713
      %789 = vmatmul.mubr.bf16.gmra.mxu0 %v712
      %v790 = vpop.f32.mrf.mxu0
      %v791 = vadd.f32 0.0, %v790
      %v792 = vpop.f32.mrf.mxu0
      %v793 = vpop.f32.mrf.mxu0
      %v794 = vadd.f32 0.0, %v793
      %v795 = vpop.f32.mrf.mxu0
      %796 = vmatprep.mubr.bf16.mxu0 %v715
      %797 = vmatmul.mubr.bf16.gmra.mxu0 %v714
      %v798 = vpop.f32.mrf.mxu0
      %v799 = vadd.f32 0.0, %v798
      %v800 = vpop.f32.mrf.mxu0
      %v801 = vpop.f32.mrf.mxu0
      %v802 = vadd.f32 0.0, %v801
      %v803 = vpop.f32.mrf.mxu0
      %804 = vmatprep.mubr.bf16.mxu0 %v717
      %805 = vmatmul.mubr.bf16.gmra.mxu0 %v716
      %v806 = vpop.f32.mrf.mxu0
      %v807 = vadd.f32 0.0, %v806
      %v808 = vpop.f32.mrf.mxu0
      %v809 = vpop.f32.mrf.mxu0
      %v810 = vadd.f32 0.0, %v809
      %v811 = vpop.f32.mrf.mxu0
      %812 = vmatprep.mubr.bf16.mxu0 %v719
      %813 = vmatmul.mubr.bf16.gmra.mxu0 %v718
      %v814 = vpop.f32.mrf.mxu0
      %v815 = vadd.f32 0.0, %v814
      %v816 = vpop.f32.mrf.mxu0
      %v817 = vpop.f32.mrf.mxu0
      %v818 = vadd.f32 0.0, %v817
      %v819 = vpop.f32.mrf.mxu0
      %820 = vmatprep.mubr.bf16.mxu0 %v721
      %821 = vmatmul.mubr.bf16.gmra.mxu0 %v720
      %v822 = vpop.f32.mrf.mxu0
      %v823 = vadd.f32 0.0, %v822
      %v824 = vpop.f32.mrf.mxu0
      %v825 = vpop.f32.mrf.mxu0
      %v826 = vadd.f32 0.0, %v825
      %v827 = vpop.f32.mrf.mxu0
      %828 = vmatprep.mubr.bf16.mxu0 %v723
      %829 = vmatmul.mubr.bf16.gmra.mxu0 %v722
      %v830 = vpop.f32.mrf.mxu0
      %v831 = vadd.f32 0.0, %v830
      %v832 = vpop.f32.mrf.mxu0
      %v833 = vpop.f32.mrf.mxu0
      %v834 = vadd.f32 0.0, %v833
      %v835 = vpop.f32.mrf.mxu0
      %836 = vdwg.mxu0
      %v837 = vmax.f32 %v775, 0.0
      %v838 = vmax.f32 %v778, 0.0
      %v839 = vmax.f32 %v783, 0.0
      %v840 = vmax.f32 %v786, 0.0
      %v841 = vmax.f32 %v791, 0.0
      %v842 = vmax.f32 %v794, 0.0
      %v843 = vmax.f32 %v799, 0.0
      %v844 = vmax.f32 %v802, 0.0
      %v845 = vmax.f32 %v807, 0.0
      %v846 = vmax.f32 %v810, 0.0
      %v847 = vmax.f32 %v815, 0.0
      %v848 = vmax.f32 %v818, 0.0
      %v849 = vmax.f32 %v823, 0.0
      %v850 = vmax.f32 %v826, 0.0
      %v851 = vmax.f32 %v831, 0.0
      %v852 = vmax.f32 %v834, 0.0
      %v853 = vld [vmem:[%s4] sm:$0xff]
      %v854 = vld [vmem:[%s4 + $0x8] sm:$0xff]
      %v855 = vld [vmem:[%s4 + $0x10] sm:$0xff]
      %v856 = vld [vmem:[%s4 + $0x18] sm:$0xff]
      %v857 = vld [vmem:[%s5] sm:$0x1]
      %v859 = vlaneseq
      %v860 = vshrl.u32 %v859, 7
      %v861 = vsub.s32 0, %v860
      %v862 = vrot.slane %v857, %v861
      %vm864 = vcmask 261120
      %v866 = vsel %vm864, %v837, 0
      %v869 = vsel %vm864, %v838, 0
      %v872 = vsel %vm864, %v839, 0
      %v875 = vsel %vm864, %v840, 0
      %v878 = vsel %vm864, %v841, 0
      %v881 = vsel %vm864, %v842, 0
      %v884 = vsel %vm864, %v843, 0
      %v887 = vsel %vm864, %v844, 0
      %v890 = vsel %vm864, %v845, 0
      %v893 = vsel %vm864, %v846, 0
      %v896 = vsel %vm864, %v847, 0
      %v899 = vsel %vm864, %v848, 0
      %v902 = vsel %vm864, %v849, 0
      %v905 = vsel %vm864, %v850, 0
      %v908 = vsel %vm864, %v851, 0
      %v911 = vsel %vm864, %v852, 0
      %913 = vmatprep.subr.mxu0 0.0
      %914 = vmatpush1.msra.mxu0 0.0
      %915 = vmatprep.subr.mxu0 0.0
      %916 = vmatpush1.msra.mxu0 0.0
      %917 = vmatprep.subr.mxu0 0.0
      %918 = vmatpush1.msra.mxu0 0.0
      %919 = vmatprep.subr.mxu0 0.0
      %920 = vmatpush1.msra.mxu0 0.0
      %921 = vmatprep.subr.mxu0 0.0
      %922 = vmatpush1.msra.mxu0 0.0
      %923 = vmatprep.subr.mxu0 0.0
      %924 = vmatpush1.msra.mxu0 0.0
      %925 = vmatprep.subr.mxu0 0.0
      %926 = vmatpush1.msra.mxu0 0.0
      %927 = vmatprep.subr.mxu0 0.0
      %928 = vmatpush1.msra.mxu0 0.0
      %929 = vmatprep.subr.mxu0 0.0
      %930 = vmatpush1.msra.mxu0 0.0
      %931 = vmatprep.subr.mxu0 0.0
      %932 = vmatpush1.msra.mxu0 0.0
      %933 = vmatprep.subr.mxu0 0.0
      %934 = vmatpush1.msra.mxu0 0.0
      %935 = vmatprep.subr.mxu0 0.0
      %936 = vmatpush1.msra.mxu0 0.0
      %937 = vmatprep.subr.mxu0 0.0
      %938 = vmatpush1.msra.mxu0 %v856
      %939 = vmatprep.subr.mxu0 0.0
      %940 = vmatpush1.msra.mxu0 %v855
      %941 = vmatprep.subr.mxu0 0.0
      %942 = vmatpush1.msra.mxu0 %v854
      %943 = vmatprep.subr.mxu0 0.0
      %944 = vmatpush1.msra.mxu0 %v853
      %945 = vmatprep.subr.mxu0 0.0
      %946 = vmatpush2.msra.mxu0 0.0
      %947 = vmatprep.subr.mxu0 0.0
      %948 = vmatpush2.msra.mxu0 0.0
      %949 = vmatprep.subr.mxu0 0.0
      %950 = vmatpush2.msra.mxu0 0.0
      %951 = vmatprep.subr.mxu0 0.0
      %952 = vmatpush2.msra.mxu0 0.0
      %953 = vmatprep.subr.mxu0 0.0
      %954 = vmatpush2.msra.mxu0 0.0
      %955 = vmatprep.subr.mxu0 0.0
      %956 = vmatpush2.msra.mxu0 0.0
      %957 = vmatprep.subr.mxu0 0.0
      %958 = vmatpush2.msra.mxu0 0.0
      %959 = vmatprep.subr.mxu0 0.0
      %960 = vmatpush2.msra.mxu0 0.0
      %961 = vmatprep.subr.mxu0 0.0
      %962 = vmatpush2.msra.mxu0 0.0
      %963 = vmatprep.subr.mxu0 0.0
      %964 = vmatpush2.msra.mxu0 0.0
      %965 = vmatprep.subr.mxu0 0.0
      %966 = vmatpush2.msra.mxu0 0.0
      %967 = vmatprep.subr.mxu0 0.0
      %968 = vmatpush2.msra.mxu0 0.0
      %969 = vmatprep.subr.mxu0 0.0
      %970 = vmatpush2.msra.mxu0 0.0
      %971 = vmatprep.subr.mxu0 0.0
      %972 = vmatpush2.msra.mxu0 0.0
      %973 = vmatprep.subr.mxu0 0.0
      %974 = vmatpush2.msra.mxu0 0.0
      %975 = vmatprep.subr.mxu0 0.0
      %976 = vmatpush2.msra.mxu0 0.0
      %977 = vmatprep.mubr.f32.mxu0 0.0
      %978 = vmatmul.mubr.f32.gmra.mxu0 %v866
      %v979 = vpop.f32.mrf.mxu0
      %v980 = vadd.f32 %v862, %v979
      %v981 = vpop.f32.mrf.mxu0
      %982 = vmatprep.mubr.f32.mxu0 0.0
      %983 = vmatmul.mubr.f32.gmra.mxu0 %v869
      %v984 = vpop.f32.mrf.mxu0
      %v985 = vadd.f32 %v862, %v984
      %v986 = vpop.f32.mrf.mxu0
      %987 = vmatprep.mubr.f32.mxu0 0.0
      %988 = vmatmul.mubr.f32.gmra.mxu0 %v872
      %v989 = vpop.f32.mrf.mxu0
      %v990 = vadd.f32 %v862, %v989
      %v991 = vpop.f32.mrf.mxu0
      %992 = vmatprep.mubr.f32.mxu0 0.0
      %993 = vmatmul.mubr.f32.gmra.mxu0 %v875
      %v994 = vpop.f32.mrf.mxu0
      %v995 = vadd.f32 %v862, %v994
      %v996 = vpop.f32.mrf.mxu0
      %997 = vmatprep.mubr.f32.mxu0 0.0
      %998 = vmatmul.mubr.f32.gmra.mxu0 %v878
      %v999 = vpop.f32.mrf.mxu0
      %v1000 = vadd.f32 %v862, %v999
      %v1001 = vpop.f32.mrf.mxu0
      %1002 = vmatprep.mubr.f32.mxu0 0.0
      %1003 = vmatmul.mubr.f32.gmra.mxu0 %v881
      %v1004 = vpop.f32.mrf.mxu0
      %v1005 = vadd.f32 %v862, %v1004
      %v1006 = vpop.f32.mrf.mxu0
      %1007 = vmatprep.mubr.f32.mxu0 0.0
      %1008 = vmatmul.mubr.f32.gmra.mxu0 %v884
      %v1009 = vpop.f32.mrf.mxu0
      %v1010 = vadd.f32 %v862, %v1009
      %v1011 = vpop.f32.mrf.mxu0
      %1012 = vmatprep.mubr.f32.mxu0 0.0
      %1013 = vmatmul.mubr.f32.gmra.mxu0 %v887
      %v1014 = vpop.f32.mrf.mxu0
      %v1015 = vadd.f32 %v862, %v1014
      %v1016 = vpop.f32.mrf.mxu0
      %1017 = vmatprep.mubr.f32.mxu0 0.0
      %1018 = vmatmul.mubr.f32.gmra.mxu0 %v890
      %v1019 = vpop.f32.mrf.mxu0
      %v1020 = vadd.f32 %v862, %v1019
      %v1021 = vpop.f32.mrf.mxu0
      %1022 = vmatprep.mubr.f32.mxu0 0.0
      %1023 = vmatmul.mubr.f32.gmra.mxu0 %v893
      %v1024 = vpop.f32.mrf.mxu0
      %v1025 = vadd.f32 %v862, %v1024
      %v1026 = vpop.f32.mrf.mxu0
      %1027 = vmatprep.mubr.f32.mxu0 0.0
      %1028 = vmatmul.mubr.f32.gmra.mxu0 %v896
      %v1029 = vpop.f32.mrf.mxu0
      %v1030 = vadd.f32 %v862, %v1029
      %v1031 = vpop.f32.mrf.mxu0
      %1032 = vmatprep.mubr.f32.mxu0 0.0
      %1033 = vmatmul.mubr.f32.gmra.mxu0 %v899
      %v1034 = vpop.f32.mrf.mxu0
      %v1035 = vadd.f32 %v862, %v1034
      %v1036 = vpop.f32.mrf.mxu0
      %1037 = vmatprep.mubr.f32.mxu0 0.0
      %1038 = vmatmul.mubr.f32.gmra.mxu0 %v902
      %v1039 = vpop.f32.mrf.mxu0
      %v1040 = vadd.f32 %v862, %v1039
      %v1041 = vpop.f32.mrf.mxu0
      %1042 = vmatprep.mubr.f32.mxu0 0.0
      %1043 = vmatmul.mubr.f32.gmra.mxu0 %v905
      %v1044 = vpop.f32.mrf.mxu0
      %v1045 = vadd.f32 %v862, %v1044
      %v1046 = vpop.f32.mrf.mxu0
      %1047 = vmatprep.mubr.f32.mxu0 0.0
      %1048 = vmatmul.mubr.f32.gmra.mxu0 %v908
      %v1049 = vpop.f32.mrf.mxu0
      %v1050 = vadd.f32 %v862, %v1049
      %v1051 = vpop.f32.mrf.mxu0
      %1052 = vmatprep.mubr.f32.mxu0 0.0
      %1053 = vmatmul.mubr.f32.gmra.mxu0 %v911
      %v1054 = vpop.f32.mrf.mxu0
      %v1055 = vadd.f32 %v862, %v1054
      %v1056 = vpop.f32.mrf.mxu0
      %1057 = vdwg.mxu0
      %v1058 = vpack.c.bf16 %v985, %v980
      %v1059 = vpack.c.bf16 %v995, %v990
      %v1060 = vpack.c.bf16 %v1005, %v1000
      %v1061 = vpack.c.bf16 %v1015, %v1010
      %v1062 = vpack.c.bf16 %v1025, %v1020
      %v1063 = vpack.c.bf16 %v1035, %v1030
      %v1064 = vpack.c.bf16 %v1045, %v1040
      %v1065 = vpack.c.bf16 %v1055, %v1050
      %v1074 = vunpack.c.l.b16 %v1058
      %v1075 = vunpack.c.h.b16 %v1058
      %v1076 = vunpack.c.l.b16 %v1059
      %v1077 = vunpack.c.h.b16 %v1059
      %v1078 = vunpack.c.l.b16 %v1060
      %v1079 = vunpack.c.h.b16 %v1060
      %v1080 = vunpack.c.l.b16 %v1061
      %v1081 = vunpack.c.h.b16 %v1061
      %v1082 = vunpack.c.l.b16 %v1062
      %v1083 = vunpack.c.h.b16 %v1062
      %v1084 = vunpack.c.l.b16 %v1063
      %v1085 = vunpack.c.h.b16 %v1063
      %v1086 = vunpack.c.l.b16 %v1064
      %v1087 = vunpack.c.h.b16 %v1064
      %v1088 = vunpack.c.l.b16 %v1065
      %v1089 = vunpack.c.h.b16 %v1065
      %v1090 = vpack.c.b16 %v1074, %v1074
      %v1091 = vpack.c.b16 %v1075, %v1075
      %v1092 = vpack.c.b16 %v1076, %v1076
      %v1093 = vpack.c.b16 %v1077, %v1077
      %v1094 = vpack.c.b16 %v1078, %v1078
      %v1095 = vpack.c.b16 %v1079, %v1079
      %v1096 = vpack.c.b16 %v1080, %v1080
      %v1097 = vpack.c.b16 %v1081, %v1081
      %v1098 = vpack.c.b16 %v1082, %v1082
      %v1099 = vpack.c.b16 %v1083, %v1083
      %v1100 = vpack.c.b16 %v1084, %v1084
      %v1101 = vpack.c.b16 %v1085, %v1085
      %v1102 = vpack.c.b16 %v1086, %v1086
      %v1103 = vpack.c.b16 %v1087, %v1087
      %v1104 = vpack.c.b16 %v1088, %v1088
      %v1105 = vpack.c.b16 %v1089, %v1089
      %vm1122 = vcmask 257024
      %1123 = vst.msk [vmem:[%s256] sm:$0xf] %vm1122, %v1090
      %1124 = vst.msk [vmem:[%s256 + $0x4] sm:$0xf] %vm1122, %v1091
      %1125 = vst.msk [vmem:[%s256 + $0x8] sm:$0xf] %vm1122, %v1092
      %1126 = vst.msk [vmem:[%s256 + $0xc] sm:$0xf] %vm1122, %v1093
      %1127 = vst.msk [vmem:[%s256 + $0x10] sm:$0xf] %vm1122, %v1094
      %1128 = vst.msk [vmem:[%s256 + $0x14] sm:$0xf] %vm1122, %v1095
      %1129 = vst.msk [vmem:[%s256 + $0x18] sm:$0xf] %vm1122, %v1096
      %1130 = vst.msk [vmem:[%s256 + $0x1c] sm:$0xf] %vm1122, %v1097
      %1131 = vst.msk [vmem:[%s256 + $0x20] sm:$0xf] %vm1122, %v1098
      %1132 = vst.msk [vmem:[%s256 + $0x24] sm:$0xf] %vm1122, %v1099
      %1133 = vst.msk [vmem:[%s256 + $0x28] sm:$0xf] %vm1122, %v1100
      %1134 = vst.msk [vmem:[%s256 + $0x2c] sm:$0xf] %vm1122, %v1101
      %1135 = vst.msk [vmem:[%s256 + $0x30] sm:$0xf] %vm1122, %v1102
      %1136 = vst.msk [vmem:[%s256 + $0x34] sm:$0xf] %vm1122, %v1103
      %1137 = vst.msk [vmem:[%s256 + $0x38] sm:$0xf] %vm1122, %v1104
      %1138 = vst.msk [vmem:[%s256 + $0x3c] sm:$0xf] %vm1122, %v1105
      %s1139 = smul.u32 16, %s17
      %p1140 = scmp.lt.s32.totalorder %s1139, 31
      %s1141 = scalar_select %p1140, %s1139, 31
      %s1142 = smul.addr %s1141, 4
      %s1143 = scalar_lea.vmem %s6, %s1142
      // Predicated region
      $region45: #{tpu_custom_call.1} parent=43 // pred_check
        %p1144 = pneg %p166
      $region46: #{tpu_custom_call.1} parent=43 // pred_check_branch
        %1146 = sbr.rel (%p1144) target = $region48
      $region47: #{tpu_custom_call.1} parent=43 // pred_region
        %s1147 = smul.u32 16, %s17
      $region48: #{tpu_custom_call.1} parent=43 // pred_fallthru
        _
    $region44: #{tpu_custom_call.1} parent=5 // pred_fallthru
      _
    %p1148 = scmp.le.s32.totalorder 2, %s12
    // Predicated region
    $region49: #{tpu_custom_call.1} parent=5 // pred_check
      %p1149 = pneg %p1148
    $region50: #{tpu_custom_call.1} parent=5 // pred_check_branch
      %1151 = sbr.rel (%p1149) target = $region52
    $region51: #{tpu_custom_call.1} parent=5 // pred_region
      %s1152 = ssub.s32 %s12, 2
      // Predicated region
      $region53: #{tpu_custom_call.1} parent=51 // pred_check
        %p1153 = pneg %p172
      $region54: #{tpu_custom_call.1} parent=51 // pred_check_branch
        %1155 = sbr.rel (%p1153) target = $region56
      $region55: #{tpu_custom_call.1} parent=51 // pred_region
        %s1156 = smul.u32 16, %s18
        %p1157 = scmp.lt.s32.totalorder %s1156, 31
        %s1158 = scalar_select %p1157, %s1156, 31
        %s1159 = smul.addr %s1158, 4
        %s1160 = scalar_lea.vmem %s6, %s1159
      $region56: #{tpu_custom_call.1} parent=51 // pred_fallthru
        _
    $region52: #{tpu_custom_call.1} parent=5 // pred_fallthru
      _
  $region6: #{tpu_custom_call.1} parent=0 // loop_footer
    %s16 = sadd.s32 1, %s12
  $region7: #{tpu_custom_call.1} parent=0 // loop_footer_branch
    %11 = sbr.rel target = $region3
  $region8: #{tpu_custom_call.1} parent=0 // loop_exit
    _

</llo_original>
